<compile_context>
chip_gen: v5e
topology: v5e:2x2
jax: 0.10.0
libtpu: 0.0.40
codegen_flags: <defaults>
</compile_context>

<pallas_src>
import jax
import jax.numpy as jnp
from jax.experimental import pallas as pl
from jax.experimental.pallas import tpu as pltpu

_TWO_POW_31 = float(2 ** 31)
_LANE = 128

# Remember whether CORE_PARALLEL lowers on this chip so the probe is paid once.
_CORE_PARALLEL_OK = [True]


def _round_up(a: int, b: int) -> int:
    return ((a + b - 1) // b) * b


def _linear_dequant_kernel(c_ref, x_ref, o_ref):
    # c_ref: (1,) f32 folded constant in SMEM; x_ref/o_ref: (block_rows, 128) tiles.
    o_ref[...] = x_ref[...].astype(jnp.float32) * c_ref[0]


def linear_dequantize(x, scale_x, scale_w, *, block_rows=4096):
    """x: int32 (or float) NCHW tensor; scale_x, scale_w: shape-(1,) float32 scalars."""
    orig_shape = x.shape
    n = x.size

    # Folded scalar constant, computed once in the wrapper (not per grid step):
    #   c = round(2**31 / (scale_x * scale_w)) * 2**31
    # Multiplying M_0 by 2**31 is an exact power-of-two scale, so this matches the
    # unfused (x * M_0) << 31 bit-for-bit.
    sx = scale_x.reshape(-1)[0].astype(jnp.float32)
    sw = scale_w.reshape(-1)[0].astype(jnp.float32)
    m = 1.0 / (sx * sw)                       # self.M
    m0 = jnp.round(m * _TWO_POW_31)           # M_0
    c = (m0 * _TWO_POW_31).reshape(1)

    # Lane-dense slab.  Pad (an HBM copy) only when n is not already a multiple of
    # the 128-lane width; otherwise the reshape is free and x streams as-is.
    rows = -(-n // _LANE)
    x_flat = x.reshape(-1)
    if n % _LANE != 0:
        rows = _round_up(rows, 8)
        x_flat = jnp.pad(x_flat, (0, rows * _LANE - n))
    x2d = x_flat.reshape(rows, _LANE)

    # 2 MiB in + 2 MiB out per grid step at the default block_rows=4096 — enough to
    # amortize per-step overhead even on v7x's 3.2 TB/s HBM, while the 8 MiB
    # double-buffered footprint fits every chip's default scoped-VMEM budget.
    block_rows = max(8, min(_round_up(block_rows, 8), _round_up(rows, 8)))
    grid = (pl.cdiv(rows, block_rows),)       # final partial block is masked by Pallas

    per_step_bytes = 2 * block_rows * _LANE * (4 + 4)   # dbl-buffered i32 in + f32 out
    vmem_limit = None
    if per_step_bytes > 12 * 1024 * 1024:               # only for oversized user tiles
        vmem_limit = int(per_step_bytes + (4 << 20))

    def build(semantics):
        kwargs = dict(dimension_semantics=semantics)
        if vmem_limit is not None:
            kwargs["vmem_limit_bytes"] = vmem_limit
        return pl.pallas_call(
            _linear_dequant_kernel,
            out_shape=jax.ShapeDtypeStruct((rows, _LANE), jnp.float32),
            grid=grid,
            in_specs=[
                pl.BlockSpec(memory_space=pltpu.SMEM),                # folded scalar
                pl.BlockSpec((block_rows, _LANE), lambda i: (i, 0)),  # x tile
            ],
            out_specs=pl.BlockSpec((block_rows, _LANE), lambda i: (i, 0)),
            compiler_params=pltpu.CompilerParams(**kwargs),
            cost_estimate=pl.CostEstimate(
                flops=2 * n, transcendentals=0, bytes_accessed=8 * n),
        )

    # Prefer CORE_PARALLEL so v7x shards the streaming grid across both TensorCores;
    # fall back to plain "parallel" where that is unsupported (no-op on v5e/v6e).
    core_par = getattr(pltpu, "CORE_PARALLEL", None)
    candidates = []
    if core_par is not None and _CORE_PARALLEL_OK[0]:
        candidates.append((core_par,))
    candidates.append(("parallel",))

    out2d = None
    last_err = None
    for sem in candidates:
        try:
            out2d = jax.block_until_ready(build(sem)(c, x2d))
            break
        except Exception as err:  # lowering/compile failure -> try next semantics
            last_err = err
            if core_par is not None and sem and sem[0] is core_par:
                _CORE_PARALLEL_OK[0] = False
            out2d = None
    if out2d is None:
        raise last_err

    out_flat = out2d.reshape(-1)
    if out_flat.size != n:          # only slice (an HBM copy) on the padded path
        out_flat = out_flat[:n]
    return out_flat.reshape(orig_shape)


# TODO(synk): backward() (grad * M) is not part of the requested forward kernel.


if __name__ == "__main__":
    key = jax.random.PRNGKey(0)
    kx, ksx, ksw = jax.random.split(key, 3)

    # NCHW quantized activations (int32 accumulator-style values).
    x = jax.random.randint(kx, (2, 4, 16, 16), -128, 128, dtype=jnp.int32)
    # Positive scalar scales, shape (1,) float32.
    scale_x = jax.random.uniform(ksx, (1,), jnp.float32, 0.05, 0.2)
    scale_w = jax.random.uniform(ksw, (1,), jnp.float32, 0.01, 0.1)

    out = jax.block_until_ready(linear_dequantize(x, scale_x, scale_w))

    # Pure-JAX reference of the same semantics (unfused form).
    m = 1.0 / (scale_x[0] * scale_w[0])
    m0 = jnp.round(m * _TWO_POW_31)
    expected = x.astype(jnp.float32) * m0 * _TWO_POW_31

    assert out.shape == x.shape and out.dtype == jnp.float32
    assert jnp.allclose(out, expected, rtol=1e-6), "mismatch vs reference"

    # Non-128-divisible shape exercises the padded / masked-partial-block path.
    x_big = jax.random.randint(key, (3, 5, 17, 19), -128, 128, dtype=jnp.int32)
    out_big = jax.block_until_ready(linear_dequantize(x_big, scale_x, scale_w))
    expected_big = x_big.astype(jnp.float32) * m0 * _TWO_POW_31
    assert out_big.shape == x_big.shape
    assert jnp.allclose(out_big, expected_big, rtol=1e-6), "mismatch vs reference (padded path)"

    print("KERNEL_OK")
</pallas_src>

<mosaic_0001>
module attributes {stable_mosaic.version = 11 : i64} {
  func.func @_linear_dequant_kernel(%arg0: i32, %arg1: memref<1xf32, #tpu.memory_space<smem>>, %arg2: memref<16x128xi32, #tpu.memory_space<vmem>>, %arg3: memref<16x128xf32, #tpu.memory_space<vmem>>) attributes {dimension_semantics = [#tpu.dimension_semantics<core_parallel>], iteration_bounds = array<i64: 1>, scalar_prefetch = 0 : i64, scratch_operands = 0 : i64, tpu.core_type = #tpu.core_type<tc>, window_params = [{transform_indices = @transform_0, window_bounds = array<i64: 1>}, {transform_indices = @transform_1, window_bounds = array<i64: 16, 128>}, {transform_indices = @transform_2, window_bounds = array<i64: 16, 128>}]} {
    %c0 = arith.constant 0 : index
    %c0_0 = arith.constant 0 : index
    %0 = vector.load %arg2[%c0, %c0_0] : memref<16x128xi32, #tpu.memory_space<vmem>>, vector<16x128xi32>
    %1 = arith.sitofp %0 : vector<16x128xi32> to vector<16x128xf32>
    %c0_1 = arith.constant 0 : index
    %2 = memref.load %arg1[%c0_1] : memref<1xf32, #tpu.memory_space<smem>>
    %3 = vector.broadcast %2 : f32 to vector<16x128xf32>
    %4 = arith.mulf %1, %3 : vector<16x128xf32>
    %c0_2 = arith.constant 0 : index
    %c0_3 = arith.constant 0 : index
    %5 = vector.load %arg3[%c0_2, %c0_3] : memref<16x128xf32, #tpu.memory_space<vmem>>, vector<16x128xf32>
    tpu.vector_store %arg3[%c0_2, %c0_3], %4 {strides = array<i32>} : memref<16x128xf32, #tpu.memory_space<vmem>>, vector<16x128xf32>,
    return
  }
  func.func @transform_0(%arg0: i32) -> i32 {
    %c0_i32 = arith.constant 0 : i32
    %c0_i32_0 = arith.constant 0 : i32
    return %c0_i32 : i32
  }
  func.func @transform_1(%arg0: i32) -> (i32, i32) {
    %c0_i32 = arith.constant 0 : i32
    %c0_i32_0 = arith.constant 0 : i32
    return %arg0, %c0_i32 : i32, i32
  }
  func.func @transform_2(%arg0: i32) -> (i32, i32) {
    %c0_i32 = arith.constant 0 : i32
    %c0_i32_0 = arith.constant 0 : i32
    return %arg0, %c0_i32 : i32, i32
  }
}

module attributes {stable_mosaic.version = 11 : i64} {
  func.func @_linear_dequant_kernel(%arg0: i32, %arg1: memref<1xf32, #tpu.memory_space<smem>>, %arg2: memref<16x128xi32, #tpu.memory_space<vmem>>, %arg3: memref<16x128xf32, #tpu.memory_space<vmem>>) attributes {dimension_semantics = [#tpu.dimension_semantics<parallel>], iteration_bounds = array<i64: 1>, scalar_prefetch = 0 : i64, scratch_operands = 0 : i64, tpu.core_type = #tpu.core_type<tc>, window_params = [{transform_indices = @transform_0, window_bounds = array<i64: 1>}, {transform_indices = @transform_1, window_bounds = array<i64: 16, 128>}, {transform_indices = @transform_2, window_bounds = array<i64: 16, 128>}]} {
    %c0 = arith.constant 0 : index
    %c0_0 = arith.constant 0 : index
    %0 = vector.load %arg2[%c0, %c0_0] : memref<16x128xi32, #tpu.memory_space<vmem>>, vector<16x128xi32>
    %1 = arith.sitofp %0 : vector<16x128xi32> to vector<16x128xf32>
    %c0_1 = arith.constant 0 : index
    %2 = memref.load %arg1[%c0_1] : memref<1xf32, #tpu.memory_space<smem>>
    %3 = vector.broadcast %2 : f32 to vector<16x128xf32>
    %4 = arith.mulf %1, %3 : vector<16x128xf32>
    %c0_2 = arith.constant 0 : index
    %c0_3 = arith.constant 0 : index
    %5 = vector.load %arg3[%c0_2, %c0_3] : memref<16x128xf32, #tpu.memory_space<vmem>>, vector<16x128xf32>
    tpu.vector_store %arg3[%c0_2, %c0_3], %4 {strides = array<i32>} : memref<16x128xf32, #tpu.memory_space<vmem>>, vector<16x128xf32>,
    return
  }
  func.func @transform_0(%arg0: i32) -> i32 {
    %c0_i32 = arith.constant 0 : i32
    %c0_i32_0 = arith.constant 0 : i32
    return %c0_i32 : i32
  }
  func.func @transform_1(%arg0: i32) -> (i32, i32) {
    %c0_i32 = arith.constant 0 : i32
    %c0_i32_0 = arith.constant 0 : i32
    return %arg0, %c0_i32 : i32, i32
  }
  func.func @transform_2(%arg0: i32) -> (i32, i32) {
    %c0_i32 = arith.constant 0 : i32
    %c0_i32_0 = arith.constant 0 : i32
    return %arg0, %c0_i32 : i32, i32
  }
}

</mosaic_0001>

<llo_original>
// kernel: tpu_custom_call.1
$region0: #{tpu_custom_call.1}
  #allocation0 [shape = 'u32[]', space=smem, size = 0x4, offset = 0x4, fixed_abs, tag = 'smem constant byte address 0x4 - core index']
  #allocation1 [shape = 'u32[72,128]{1,0:T(1,128)}', space=vmem, size = 0x9000, scoped, tag = 'internal scratch']
  #allocation2 [shape = 'f32[1]{0:T(128)S(6)}', space=smem, size = 0x200, scoped, tag = 'scoped memory for tpu_custom_call.1']
  %s0 = inlined_call_operand.<no memory space> [shape: f32[1], index: 0, kind: input, shape index: {}]
  %s1 = inlined_call_operand.hbm [shape: s32[16,128], index: 1, kind: input, shape index: {}]
  %s2 = inlined_call_operand.hbm [shape: f32[16,128], index: 2, kind: output, shape index: {}]
  %s3 = sld [smem:[#allocation0]]
  $region22: #{tpu_custom_call.1} parent=0
    _
  %s5 = ssub.s32 1, %s3
  %s6 = scalar_select 0, %s5, %s3
  %7 = sst [smem:[#allocation2]] %s0
  $region1: #{tpu_custom_call.1} parent=0
    #allocation3 [shape = 'u8[8192]{0}', space=vmem, size = 0x2000, scoped, tag = 'input window, operand 1, single buffered']
    #allocation4 [shape = 's32[1]{0}', space=sflag, size = 0x4, scoped, tag = 'scoped memory for tpu_custom_call.1']
    #allocation5 [shape = 's32[1]{0}', space=sflag, size = 0x4, scoped, tag = 'scoped memory for tpu_custom_call.1']
    #allocation6 [shape = 'u8[8192]{0}', space=vmem, size = 0x2000, scoped, tag = 'output window, operand 0, single buffered']
    %8 = vsyncpa [#allocation4], 0
    %9 = vsyncpa [#allocation5], 0
    // Predicated region
    $region2: #{tpu_custom_call.1} parent=1 // pred_check
      _
    $region3: #{tpu_custom_call.1} parent=1 // pred_check_branch
      %11 = sbr.rel (0) target = $region5
    $region4: #{tpu_custom_call.1} parent=1 // pred_region
      _
    $region5: #{tpu_custom_call.1} parent=1 // pred_fallthru
      _
    // Predicated region
    $region6: #{tpu_custom_call.1} parent=1 // pred_check
      _
    $region7: #{tpu_custom_call.1} parent=1 // pred_check_branch
      %13 = sbr.rel (0) target = $region9
    $region8: #{tpu_custom_call.1} parent=1 // pred_region
      %s14 = smul.u32 2, %s6
      %16 = vsyncadd [#allocation4], 0
      %s17 = smul.addr %s14, 8
      %s18 = scalar_lea.hbm %s1, %s17
      %s19 = sshll.u32 %s18, 4
      %s20 = int_to_ptr.hbm [resolvable:$true] %s19
      %s21 = sshll.u32 [#allocation3], 4
      %s22 = int_to_ptr.vmem [resolvable:$true] %s21
      %27 = dma.hbm_to_vmem [thread:$0]  %s20, 256, %s22, [#allocation4], 128, 128, 8
    $region9: #{tpu_custom_call.1} parent=1 // pred_fallthru
      _
    // Predicated region
    $region10: #{tpu_custom_call.1} parent=1 // pred_check
      _
    $region11: #{tpu_custom_call.1} parent=1 // pred_check_branch
      %29 = sbr.rel (0) target = $region13
    $region12: #{tpu_custom_call.1} parent=1 // pred_region
      %31 = dma.done [#allocation4], 256
    $region13: #{tpu_custom_call.1} parent=1 // pred_fallthru
      _
    %s32 = smul.u32 2, %s6
    %s33 = smul.u32 2, %s6
    %v34 = vld [vmem:[#allocation3] sm:$0xff]
    %v35 = vld [vmem:[#allocation3 + $0x8] sm:$0xff]
    %v36 = vcvt.s32.f32 %v34
    %v37 = vcvt.s32.f32 %v35
    %s38 = sld [smem:[#allocation2]]
    %v39 = vstv %s38
    %v40 = vmul.f32 %v36, %v39
    %v41 = vmul.f32 %v37, %v39
    %42 = vst [vmem:[#allocation6] sm:$0xff] %v40
    %43 = vst [vmem:[#allocation6 + $0x8] sm:$0xff] %v41
    // Predicated region
    $region14: #{tpu_custom_call.1} parent=1 // pred_check
      _
    $region15: #{tpu_custom_call.1} parent=1 // pred_check_branch
      %45 = sbr.rel (0) target = $region17
    $region16: #{tpu_custom_call.1} parent=1 // pred_region
      %s46 = smul.u32 2, %s6
      %48 = vsyncadd [#allocation5], 0
      %s49 = smul.addr %s46, 8
      %s50 = scalar_lea.hbm %s2, %s49
      %s51 = sshll.u32 [#allocation6], 4
      %s52 = int_to_ptr.vmem [resolvable:$true] %s51
      %s53 = sshll.u32 %s50, 4
      %s54 = int_to_ptr.hbm [resolvable:$true] %s53
      %59 = dma.vmem_to_hbm [thread:$0]  %s52, 256, %s54, [#allocation5], 128, 128, 8
    $region17: #{tpu_custom_call.1} parent=1 // pred_fallthru
      _
    // Predicated region
    $region18: #{tpu_custom_call.1} parent=1 // pred_check
      _
    $region19: #{tpu_custom_call.1} parent=1 // pred_check_branch
      %61 = sbr.rel (0) target = $region21
    $region20: #{tpu_custom_call.1} parent=1 // pred_region
      %63 = dma.done [#allocation5], 256
    $region21: #{tpu_custom_call.1} parent=1 // pred_fallthru
      _
    %64 = vsyncpa [#allocation4], 1
    %65 = vsyncpa [#allocation5], 1

// kernel: tpu_custom_call.1
$region0: #{tpu_custom_call.1}
  #allocation0 [shape = 'u32[]', space=smem, size = 0x4, offset = 0x4, fixed_abs, tag = 'smem constant byte address 0x4 - core index']
  #allocation1 [shape = 'u32[72,128]{1,0:T(1,128)}', space=vmem, size = 0x9000, scoped, tag = 'internal scratch']
  #allocation2 [shape = 'f32[1]{0:T(128)S(6)}', space=smem, size = 0x200, scoped, tag = 'scoped memory for tpu_custom_call.1']
  %s0 = inlined_call_operand.<no memory space> [shape: f32[1], index: 0, kind: input, shape index: {}]
  %s1 = inlined_call_operand.hbm [shape: s32[16,128], index: 1, kind: input, shape index: {}]
  %s2 = inlined_call_operand.hbm [shape: f32[16,128], index: 2, kind: output, shape index: {}]
  %s3 = sld [smem:[#allocation0]]
  $region22: #{tpu_custom_call.1} parent=0
    _
  %s5 = ssub.s32 1, %s3
  %s6 = scalar_select 0, %s5, %s3
  %7 = sst [smem:[#allocation2]] %s0
  $region1: #{tpu_custom_call.1} parent=0
    #allocation3 [shape = 'u8[8192]{0}', space=vmem, size = 0x2000, scoped, tag = 'input window, operand 1, single buffered']
    #allocation4 [shape = 's32[1]{0}', space=sflag, size = 0x4, scoped, tag = 'scoped memory for tpu_custom_call.1']
    #allocation5 [shape = 's32[1]{0}', space=sflag, size = 0x4, scoped, tag = 'scoped memory for tpu_custom_call.1']
    #allocation6 [shape = 'u8[8192]{0}', space=vmem, size = 0x2000, scoped, tag = 'output window, operand 0, single buffered']
    %8 = vsyncpa [#allocation4], 0
    %9 = vsyncpa [#allocation5], 0
    // Predicated region
    $region2: #{tpu_custom_call.1} parent=1 // pred_check
      _
    $region3: #{tpu_custom_call.1} parent=1 // pred_check_branch
      %11 = sbr.rel (0) target = $region5
    $region4: #{tpu_custom_call.1} parent=1 // pred_region
      _
    $region5: #{tpu_custom_call.1} parent=1 // pred_fallthru
      _
    // Predicated region
    $region6: #{tpu_custom_call.1} parent=1 // pred_check
      _
    $region7: #{tpu_custom_call.1} parent=1 // pred_check_branch
      %13 = sbr.rel (0) target = $region9
    $region8: #{tpu_custom_call.1} parent=1 // pred_region
      %15 = vsyncadd [#allocation4], 0
      %s16 = sshll.u32 %s1, 4
      %s17 = int_to_ptr.hbm [resolvable:$true] %s16
      %s18 = sshll.u32 [#allocation3], 4
      %s19 = int_to_ptr.vmem [resolvable:$true] %s18
      %24 = dma.hbm_to_vmem [thread:$0]  %s17, 256, %s19, [#allocation4], 128, 128, 8
    $region9: #{tpu_custom_call.1} parent=1 // pred_fallthru
      _
    // Predicated region
    $region10: #{tpu_custom_call.1} parent=1 // pred_check
      _
    $region11: #{tpu_custom_call.1} parent=1 // pred_check_branch
      %26 = sbr.rel (0) target = $region13
    $region12: #{tpu_custom_call.1} parent=1 // pred_region
      %28 = dma.done [#allocation4], 256
    $region13: #{tpu_custom_call.1} parent=1 // pred_fallthru
      _
    %v29 = vld [vmem:[#allocation3] sm:$0xff]
    %v30 = vld [vmem:[#allocation3 + $0x8] sm:$0xff]
    %v31 = vcvt.s32.f32 %v29
    %v32 = vcvt.s32.f32 %v30
    %s33 = sld [smem:[#allocation2]]
    %v34 = vstv %s33
    %v35 = vmul.f32 %v31, %v34
    %v36 = vmul.f32 %v32, %v34
    %37 = vst [vmem:[#allocation6] sm:$0xff] %v35
    %38 = vst [vmem:[#allocation6 + $0x8] sm:$0xff] %v36
    // Predicated region
    $region14: #{tpu_custom_call.1} parent=1 // pred_check
      _
    $region15: #{tpu_custom_call.1} parent=1 // pred_check_branch
      %40 = sbr.rel (0) target = $region17
    $region16: #{tpu_custom_call.1} parent=1 // pred_region
      %42 = vsyncadd [#allocation5], 0
      %s43 = sshll.u32 [#allocation6], 4
      %s44 = int_to_ptr.vmem [resolvable:$true] %s43
      %s45 = sshll.u32 %s2, 4
      %s46 = int_to_ptr.hbm [resolvable:$true] %s45
      %51 = dma.vmem_to_hbm [thread:$0]  %s44, 256, %s46, [#allocation5], 128, 128, 8
    $region17: #{tpu_custom_call.1} parent=1 // pred_fallthru
      _
    // Predicated region
    $region18: #{tpu_custom_call.1} parent=1 // pred_check
      _
    $region19: #{tpu_custom_call.1} parent=1 // pred_check_branch
      %53 = sbr.rel (0) target = $region21
    $region20: #{tpu_custom_call.1} parent=1 // pred_region
      %55 = dma.done [#allocation5], 256
    $region21: #{tpu_custom_call.1} parent=1 // pred_fallthru
      _
    %56 = vsyncpa [#allocation4], 1
    %57 = vsyncpa [#allocation5], 1

</llo_original>
